<compile_context>
chip_gen: v7x
topology: tpu7x:2x2x1
jax: 0.10.0
libtpu: 0.0.40
codegen_flags: <defaults>
</compile_context>

<pallas_src>
import functools

import jax
import jax.numpy as jnp
from jax.experimental import pallas as pl
from jax.experimental.pallas import tpu as pltpu


C_FEAT = 128   # predict conv input channels
C_ATT_IN = 4   # conv_concat input channels (2 + 2)
C_OUT = 2      # both convs output 2 channels
C_SIDE = 5     # edge(2) + sal(2) + depth(1) rows of the merged side tensor


def triatt_kernel(x_ref, side_ref, wpred_ref, attw_ref, out_ref):
    # x_ref:    (128, TP)  features, channel-major (channels on sublanes)
    # side_ref: (5, TP)    rows 0-3 = concat([Edge, Sal]) channels, row 4 = Depth
    # wpred_ref:(2, 128)   predict conv weight, (out, in) layout
    # attw_ref: (8, 1)     rows 0-3 = wcat[1]-wcat[0], row 4 = bcat[1]-bcat[0],
    #                      rows 5-6 = predict bias, row 7 = pad
    # out_ref:  (2, TP)    lane-dense output block
    x = x_ref[...].astype(jnp.float32)
    s = side_ref[...].astype(jnp.float32)
    aw = attw_ref[...].astype(jnp.float32)

    # 2-class softmax over the conv_concat logits, keeping class 1:
    #   softmax(l)[1] = sigmoid(l1 - l0)
    logit = jnp.sum(s[0:4, :] * aw[0:4, :], axis=0, keepdims=True) + aw[4:5, :]
    att = jax.nn.sigmoid(logit)                       # (1, TP)

    # Per-pixel scale, factored past the 1x1 predict conv:
    #   Feature_all = Features * (1 + Depth) * (1 + Att)
    #   predict(Feature_all) = (Wp @ Features) * scale + bp
    scale = (1.0 + s[4:5, :]) * (1.0 + att)           # (1, TP)

    y = jnp.dot(wpred_ref[...].astype(jnp.float32), x,
                preferred_element_type=jnp.float32)   # (2, TP)
    out = y * scale + aw[5:7, :]                      # bias broadcast (2,1)
    out_ref[...] = out.astype(out_ref.dtype)


@functools.partial(jax.jit, static_argnames=("tile_hw",))
def triatt_forward(features, edge, sal, depth, w_cat, b_cat, w_pred, b_pred,
                   tile_hw=2048):
    """Inputs in PyTorch NCHW convention.

    features: (B, 128, H, W)   edge, sal: (B, 2, H, W)   depth: (B, 1, H, W)
    w_cat: (2, 4, 1, 1)  b_cat: (2,)   w_pred: (2, 128, 1, 1)  b_pred: (2,)
    returns: (B, 2, H, W)
    """
    B, Cf, H, W = features.shape
    HW = H * W

    # Clamp the pixel tile to the spatial extent (all static under jit).
    tp = min(tile_hw, HW)

    # Channel-major views: no data movement for the big feature tensor.
    x_cm = features.reshape(B, Cf, HW)                                 # (B,128,HW)
    side = jnp.concatenate([edge, sal, depth], axis=1).reshape(B, C_SIDE, HW)

    # Fold conv weights wrapper-side.
    wpred_m = w_pred[:, :, 0, 0]                                       # (2, 128)
    wdiff = w_cat[1, :, 0, 0] - w_cat[0, :, 0, 0]                      # (4,)
    bdiff = (b_cat[1] - b_cat[0]).reshape(1)                           # (1,)
    attw = jnp.concatenate(
        [wdiff, bdiff, b_pred, jnp.zeros((1,), jnp.float32)]
    ).astype(jnp.float32).reshape(8, 1)                                # (8, 1)

    grid = (B, pl.cdiv(HW, tp))   # tail block handled by Pallas masking
    out_cm = pl.pallas_call(
        triatt_kernel,
        out_shape=jax.ShapeDtypeStruct((B, C_OUT, HW), features.dtype),
        grid=grid,
        in_specs=[
            pl.BlockSpec((None, Cf, tp), lambda b, j: (b, 0, j)),
            pl.BlockSpec((None, C_SIDE, tp), lambda b, j: (b, 0, j)),
            pl.BlockSpec((C_OUT, Cf), lambda b, j: (0, 0)),
            pl.BlockSpec((8, 1), lambda b, j: (0, 0)),
        ],
        out_specs=pl.BlockSpec((None, C_OUT, tp), lambda b, j: (b, 0, j)),
        compiler_params=pltpu.CompilerParams(
            dimension_semantics=("parallel", "parallel")),
    )(x_cm, side, wpred_m, attw)

    # (B, 2, HW) -> (B, 2, H, W): free reshape, already NCHW.
    return out_cm.reshape(B, C_OUT, H, W)


def triatt_reference(features, edge, sal, depth, w_cat, b_cat, w_pred, b_pred):
    """Plain-JAX reference mirroring the PyTorch forward, for verification."""
    feat_d = features * depth + features
    att_in = jnp.concatenate([edge, sal], axis=1)                      # (B,4,H,W)
    att = jnp.einsum("bchw,oc->bohw", att_in, w_cat[:, :, 0, 0])
    att = att + b_cat[None, :, None, None]
    att = jax.nn.softmax(att, axis=1)[:, 1:, :, :]                     # (B,1,H,W)
    feat_all = feat_d * att + feat_d
    out = jnp.einsum("bchw,oc->bohw", feat_all, w_pred[:, :, 0, 0])
    return out + b_pred[None, :, None, None]


if __name__ == "__main__":
    key = jax.random.PRNGKey(0)
    kf, ke, ks, kd, kw1, kw2 = jax.random.split(key, 6)

    B, H, W = 2, 16, 16
    features = jax.random.normal(kf, (B, C_FEAT, H, W), jnp.float32)
    edge = jax.random.normal(ke, (B, 2, H, W), jnp.float32)
    sal = jax.random.normal(ks, (B, 2, H, W), jnp.float32)
    depth = jax.random.normal(kd, (B, 1, H, W), jnp.float32)

    # Deterministic parameter init, matching nn.init.normal_(std=0.01), zero bias.
    w_cat = 0.01 * jax.random.normal(kw1, (C_OUT, C_ATT_IN, 1, 1), jnp.float32)
    b_cat = jnp.zeros((C_OUT,), jnp.float32)
    w_pred = 0.01 * jax.random.normal(kw2, (C_OUT, C_FEAT, 1, 1), jnp.float32)
    b_pred = jnp.zeros((C_OUT,), jnp.float32)

    out = triatt_forward(features, edge, sal, depth,
                         w_cat, b_cat, w_pred, b_pred)
    out = jax.block_until_ready(out)

    ref = triatt_reference(features, edge, sal, depth,
                           w_cat, b_cat, w_pred, b_pred)
    assert out.shape == (B, 2, H, W)
    assert jnp.allclose(out, ref, atol=1e-4, rtol=1e-4)

    print("KERNEL_OK")
</pallas_src>

<mosaic_0001>
module attributes {stable_mosaic.version = 11 : i64} {
  func.func @triatt_kernel(%arg0: i32, %arg1: i32, %arg2: memref<1x128x256xf32, #tpu.memory_space<vmem>>, %arg3: memref<1x5x256xf32, #tpu.memory_space<vmem>>, %arg4: memref<2x128xf32, #tpu.memory_space<vmem>>, %arg5: memref<8x1xf32, #tpu.memory_space<vmem>>, %arg6: memref<1x2x256xf32, #tpu.memory_space<vmem>>) attributes {dimension_semantics = [#tpu.dimension_semantics<parallel>, #tpu.dimension_semantics<parallel>], iteration_bounds = array<i64: 2, 1>, scalar_prefetch = 0 : i64, scratch_operands = 0 : i64, tpu.core_type = #tpu.core_type<tc>, window_params = [{transform_indices = @transform_0, window_bounds = array<i64: 1, 128, 256>}, {transform_indices = @transform_1, window_bounds = array<i64: 1, 5, 256>}, {pipeline_mode = #tpu.pipeline_mode<synchronous>, transform_indices = @transform_2, window_bounds = array<i64: 2, 128>}, {pipeline_mode = #tpu.pipeline_mode<synchronous>, transform_indices = @transform_3, window_bounds = array<i64: 8, 1>}, {transform_indices = @transform_4, window_bounds = array<i64: 1, 2, 256>}]} {
    %c0 = arith.constant 0 : index
    %c0_0 = arith.constant 0 : index
    %c0_1 = arith.constant 0 : index
    %0 = vector.load %arg2[%c0, %c0_0, %c0_1] : memref<1x128x256xf32, #tpu.memory_space<vmem>>, vector<1x128x256xf32>
    %1 = vector.shape_cast %0 : vector<1x128x256xf32> to vector<128x256xf32>
    %c0_2 = arith.constant 0 : index
    %c0_3 = arith.constant 0 : index
    %c0_4 = arith.constant 0 : index
    %2 = vector.load %arg3[%c0_2, %c0_3, %c0_4] : memref<1x5x256xf32, #tpu.memory_space<vmem>>, vector<1x5x256xf32>
    %3 = vector.shape_cast %2 : vector<1x5x256xf32> to vector<5x256xf32>
    %c0_5 = arith.constant 0 : index
    %c0_6 = arith.constant 0 : index
    %4 = vector.load %arg5[%c0_5, %c0_6] : memref<8x1xf32, #tpu.memory_space<vmem>>, vector<8x1xf32>
    %5 = vector.extract_strided_slice %3 {offsets = [0, 0], sizes = [4, 256], strides = [1, 1]} : vector<5x256xf32> to vector<4x256xf32>
    %6 = vector.extract_strided_slice %4 {offsets = [0, 0], sizes = [4, 1], strides = [1, 1]} : vector<8x1xf32> to vector<4x1xf32>
    %7 = vector.broadcast %6 : vector<4x1xf32> to vector<4x256xf32>
    %8 = arith.mulf %5, %7 : vector<4x256xf32>
    %cst = arith.constant dense<0.000000e+00> : vector<256xf32>
    %9 = vector.multi_reduction <add>, %8, %cst [0] : vector<4x256xf32> to vector<256xf32>
    %10 = vector.shape_cast %9 : vector<256xf32> to vector<1x256xf32>
    %11 = vector.extract_strided_slice %4 {offsets = [4, 0], sizes = [1, 1], strides = [1, 1]} : vector<8x1xf32> to vector<1x1xf32>
    %12 = vector.broadcast %11 : vector<1x1xf32> to vector<1x256xf32>
    %13 = arith.addf %10, %12 : vector<1x256xf32>
    %14 = arith.negf %13 : vector<1x256xf32>
    %15 = math.exp %14 : vector<1x256xf32>
    %cst_7 = arith.constant 1.000000e+00 : f32
    %16 = vector.broadcast %cst_7 : f32 to vector<1x256xf32>
    %17 = arith.addf %16, %15 : vector<1x256xf32>
    %18 = arith.divf %16, %17 : vector<1x256xf32>
    %19 = vector.extract_strided_slice %3 {offsets = [4, 0], sizes = [1, 256], strides = [1, 1]} : vector<5x256xf32> to vector<1x256xf32>
    %cst_8 = arith.constant 1.000000e+00 : f32
    %20 = vector.broadcast %cst_8 : f32 to vector<1x256xf32>
    %21 = arith.addf %20, %19 : vector<1x256xf32>
    %cst_9 = arith.constant 1.000000e+00 : f32
    %22 = vector.broadcast %cst_9 : f32 to vector<1x256xf32>
    %23 = arith.addf %22, %18 : vector<1x256xf32>
    %24 = arith.mulf %21, %23 : vector<1x256xf32>
    %c0_10 = arith.constant 0 : index
    %c0_11 = arith.constant 0 : index
    %25 = vector.load %arg4[%c0_10, %c0_11] : memref<2x128xf32, #tpu.memory_space<vmem>>, vector<2x128xf32>
    %cst_12 = arith.constant dense<0.000000e+00> : vector<2x256xf32>
    %26 = tpu.matmul %25, %1, %cst_12 {dimension_numbers = #tpu.dot_dimension_numbers<[1], [0], [0], [1], [0, 0, 1, 1], [], []>} : vector<2x128xf32>, vector<128x256xf32>, vector<2x256xf32> -> vector<2x256xf32>
    %27 = vector.broadcast %24 : vector<1x256xf32> to vector<2x256xf32>
    %28 = arith.mulf %26, %27 : vector<2x256xf32>
    %29 = vector.extract_strided_slice %4 {offsets = [5, 0], sizes = [2, 1], strides = [1, 1]} : vector<8x1xf32> to vector<2x1xf32>
    %30 = vector.broadcast %29 : vector<2x1xf32> to vector<2x256xf32>
    %31 = arith.addf %28, %30 : vector<2x256xf32>
    %c0_13 = arith.constant 0 : index
    %c0_14 = arith.constant 0 : index
    %c0_15 = arith.constant 0 : index
    %32 = vector.load %arg6[%c0_13, %c0_14, %c0_15] : memref<1x2x256xf32, #tpu.memory_space<vmem>>, vector<1x2x256xf32>
    %33 = vector.shape_cast %32 : vector<1x2x256xf32> to vector<2x256xf32>
    %34 = vector.shape_cast %31 : vector<2x256xf32> to vector<1x2x256xf32>
    tpu.vector_store %arg6[%c0_13, %c0_14, %c0_15], %34 {strides = array<i32>} : memref<1x2x256xf32, #tpu.memory_space<vmem>>, vector<1x2x256xf32>,
    return
  }
  func.func @transform_0(%arg0: i32, %arg1: i32) -> (i32, i32, i32) {
    %c0_i32 = arith.constant 0 : i32
    %c0_i32_0 = arith.constant 0 : i32
    return %arg0, %c0_i32, %arg1 : i32, i32, i32
  }
  func.func @transform_1(%arg0: i32, %arg1: i32) -> (i32, i32, i32) {
    %c0_i32 = arith.constant 0 : i32
    %c0_i32_0 = arith.constant 0 : i32
    return %arg0, %c0_i32, %arg1 : i32, i32, i32
  }
  func.func @transform_2(%arg0: i32, %arg1: i32) -> (i32, i32) {
    %c0_i32 = arith.constant 0 : i32
    %c0_i32_0 = arith.constant 0 : i32
    %c0_i32_1 = arith.constant 0 : i32
    return %c0_i32, %c0_i32_0 : i32, i32
  }
  func.func @transform_3(%arg0: i32, %arg1: i32) -> (i32, i32) {
    %c0_i32 = arith.constant 0 : i32
    %c0_i32_0 = arith.constant 0 : i32
    %c0_i32_1 = arith.constant 0 : i32
    return %c0_i32, %c0_i32_0 : i32, i32
  }
  func.func @transform_4(%arg0: i32, %arg1: i32) -> (i32, i32, i32) {
    %c0_i32 = arith.constant 0 : i32
    %c0_i32_0 = arith.constant 0 : i32
    return %arg0, %c0_i32, %arg1 : i32, i32, i32
  }
}

</mosaic_0001>

<llo_original>
// kernel: triatt_forward.1
$region0: #{triatt_forward.1}
  #allocation0 [shape = 'u32[]', space=smem, size = 0x4, offset = 0x4, fixed_abs, tag = 'smem constant byte address 0x4 - core index']
  #allocation1 [shape = 'u32[144,128]{1,0:T(1,128)}', space=vmem, size = 0x12000, scoped, tag = 'internal scratch']
  %s0 = inlined_call_operand.vmem [shape: f32[2,128,256], index: 0, kind: input, shape index: {}]
  %s1 = inlined_call_operand.vmem [shape: f32[2,5,256], index: 1, kind: input, shape index: {}]
  %s2 = inlined_call_operand.vmem [shape: f32[2,128], index: 2, kind: input, shape index: {}]
  %s3 = inlined_call_operand.vmem [shape: f32[8,1], index: 3, kind: input, shape index: {}]
  %s4 = inlined_call_operand.vmem [shape: f32[2,2,256], index: 4, kind: output, shape index: {}]
  %s5 = sld [smem:[#allocation0]]
  $region49: #{triatt_forward.1} parent=0
    _
  %s7 = ssub.s32 1, %s5
  %s8 = scalar_select 0, %s7, %s5
  loop: start=0, step=1, limit=4
  $region2: #{triatt_forward.1} parent=0 // loop_pre_header
    _
  $region3: #{triatt_forward.1} parent=0 // loop_header
    %s10 = sphi 0, %s14
    %p11 = scmp.ge.s32.totalorder %s10, 4
    %s17 = sphi 0, %s29
    %s18 = sphi 0, %s25
    %s19 = sphi 0, %s17
    %s20 = sphi 0, %s18
    %s21 = sphi 0, %s19
    %s22 = sphi 0, %s20
    %s34 = sphi 0, %s36
    %s37 = sphi 0, %s34
    %s38 = sphi 0, %s37
    %s54 = sphi 0, %s38
    %s62 = sphi 0, %s64
    %s65 = sphi 0, %s62
    %s66 = sphi 0, %s65
    %s82 = sphi 0, %s66
    %s86 = sphi 0, %s86
    %s88 = sphi 0, %s86
    %s89 = sphi 0, %s88
    %s103 = sphi 0, %s89
    %s107 = sphi 0, %s107
    %s109 = sphi 0, %s107
    %s110 = sphi 0, %s109
    %s124 = sphi 0, %s110
    %s132 = sphi 0, %s134
    %s135 = sphi 0, %s132
    %s136 = sphi 0, %s135
    %s152 = sphi 0, %s136
  $region4: #{triatt_forward.1} parent=0 // loop_header_branch
    %13 = sbr.rel (%p11) target = $region8
  $region5: #{triatt_forward.1} parent=0 // loop_body
    %s15 = ssub.s32 %s10, 1
    %s16 = ssub.s32 %s10, 2
    %s23 = sadd.s32 1, %s18
    %p24 = scmp.ge.s32.totalorder %s23, 1
    %s25 = scalar_select %p24, 0, %s23
    %s26 = sadd.s32 1, %s17
    %s27 = scalar_select %p24, %s26, %s17
    %p28 = scmp.ge.s32.totalorder %s27, 2
    %s29 = scalar_select %p28, 0, %s27
    %s30 = ssub.s32 %s17, %s29
    %s31 = ssub.s32 %s18, %s25
    %s32 = sor.u32 %s30, %s31
    %p33 = scmp.eq.s32.totalorder %s32, 0
    %s35 = sadd.s32 %s34, 1
    %s36 = scalar_select %p33, %s34, %s35
    %p39 = pneg %p33
    %p40 = scmp.eq.s32.totalorder %s10, 1
    %p41 = por %p39, %p40
    %p42 = scmp.ne.s32.totalorder %s34, %s37
    %p43 = scmp.eq.s32.totalorder %s10, 0
    %p44 = por %p42, %p43
    %p45 = scmp.ne.s32.totalorder %s34, %s37
    %p46 = scmp.eq.s32.totalorder %s15, 1
    %p47 = por %p45, %p46
    %p48 = scmp.ne.s32.totalorder %s37, %s38
    %p49 = scmp.eq.s32.totalorder %s15, 0
    %p50 = por %p48, %p49
    %p51 = scmp.ne.s32.totalorder %s37, %s38
    %p52 = scmp.eq.s32.totalorder %s16, 1
    %p53 = por %p51, %p52
    %p55 = scmp.ne.s32.totalorder %s38, %s54
    %p56 = scmp.eq.s32.totalorder %s16, 0
    %p57 = por %p55, %p56
    %s58 = ssub.s32 %s17, %s29
    %s59 = ssub.s32 %s18, %s25
    %s60 = sor.u32 %s58, %s59
    %p61 = scmp.eq.s32.totalorder %s60, 0
    %s63 = sadd.s32 %s62, 1
    %s64 = scalar_select %p61, %s62, %s63
    %p67 = pneg %p61
    %p68 = scmp.eq.s32.totalorder %s10, 1
    %p69 = por %p67, %p68
    %p70 = scmp.ne.s32.totalorder %s62, %s65
    %p71 = scmp.eq.s32.totalorder %s10, 0
    %p72 = por %p70, %p71
    %p73 = scmp.ne.s32.totalorder %s62, %s65
    %p74 = scmp.eq.s32.totalorder %s15, 1
    %p75 = por %p73, %p74
    %p76 = scmp.ne.s32.totalorder %s65, %s66
    %p77 = scmp.eq.s32.totalorder %s15, 0
    %p78 = por %p76, %p77
    %p79 = scmp.ne.s32.totalorder %s65, %s66
    %p80 = scmp.eq.s32.totalorder %s16, 1
    %p81 = por %p79, %p80
    %p83 = scmp.ne.s32.totalorder %s66, %s82
    %p84 = scmp.eq.s32.totalorder %s16, 0
    %p85 = por %p83, %p84
    %s87 = sadd.s32 %s86, 1
    %p90 = scmp.eq.s32.totalorder %s10, 1
    %p91 = scmp.ne.s32.totalorder %s86, %s88
    %p92 = scmp.eq.s32.totalorder %s10, 0
    %p93 = por %p91, %p92
    %p94 = scmp.ne.s32.totalorder %s86, %s88
    %p95 = scmp.eq.s32.totalorder %s15, 1
    %p96 = por %p94, %p95
    %p97 = scmp.ne.s32.totalorder %s88, %s89
    %p98 = scmp.eq.s32.totalorder %s15, 0
    %p99 = por %p97, %p98
    %p100 = scmp.ne.s32.totalorder %s88, %s89
    %p101 = scmp.eq.s32.totalorder %s16, 1
    %p102 = por %p100, %p101
    %p104 = scmp.ne.s32.totalorder %s89, %s103
    %p105 = scmp.eq.s32.totalorder %s16, 0
    %p106 = por %p104, %p105
    %s108 = sadd.s32 %s107, 1
    %p111 = scmp.eq.s32.totalorder %s10, 1
    %p112 = scmp.ne.s32.totalorder %s107, %s109
    %p113 = scmp.eq.s32.totalorder %s10, 0
    %p114 = por %p112, %p113
    %p115 = scmp.ne.s32.totalorder %s107, %s109
    %p116 = scmp.eq.s32.totalorder %s15, 1
    %p117 = por %p115, %p116
    %p118 = scmp.ne.s32.totalorder %s109, %s110
    %p119 = scmp.eq.s32.totalorder %s15, 0
    %p120 = por %p118, %p119
    %p121 = scmp.ne.s32.totalorder %s109, %s110
    %p122 = scmp.eq.s32.totalorder %s16, 1
    %p123 = por %p121, %p122
    %p125 = scmp.ne.s32.totalorder %s110, %s124
    %p126 = scmp.eq.s32.totalorder %s16, 0
    %p127 = por %p125, %p126
    %s128 = ssub.s32 %s17, %s29
    %s129 = ssub.s32 %s18, %s25
    %s130 = sor.u32 %s128, %s129
    %p131 = scmp.eq.s32.totalorder %s130, 0
    %s133 = sadd.s32 %s132, 1
    %s134 = scalar_select %p131, %s132, %s133
    %p137 = pneg %p131
    %p138 = scmp.eq.s32.totalorder %s10, 1
    %p139 = por %p137, %p138
    %p140 = scmp.ne.s32.totalorder %s132, %s135
    %p141 = scmp.eq.s32.totalorder %s10, 0
    %p142 = por %p140, %p141
    %p143 = scmp.ne.s32.totalorder %s132, %s135
    %p144 = scmp.eq.s32.totalorder %s15, 1
    %p145 = por %p143, %p144
    %p146 = scmp.ne.s32.totalorder %s135, %s136
    %p147 = scmp.eq.s32.totalorder %s15, 0
    %p148 = por %p146, %p147
    %p149 = scmp.ne.s32.totalorder %s135, %s136
    %p150 = scmp.eq.s32.totalorder %s16, 1
    %p151 = por %p149, %p150
    %p153 = scmp.ne.s32.totalorder %s136, %s152
    %p154 = scmp.eq.s32.totalorder %s16, 0
    %p155 = por %p153, %p154
    %p156 = scmp.le.s32.totalorder 1, %s10
    %p157 = scmp.lt.s32.totalorder %s10, 3
    %p158 = pnand %p156, %p157
    %p159 = pneg %p158
    // Predicated region
    $region9: #{triatt_forward.1} parent=5 // pred_check
      _
    $region10: #{triatt_forward.1} parent=5 // pred_check_branch
      %161 = sbr.rel (%p158) target = $region12
    $region11: #{triatt_forward.1} parent=5 // pred_region
      %s162 = ssub.s32 %s10, 1
      // Predicated region
      $region13: #{triatt_forward.1} parent=11 // pred_check
        %p163 = pneg %p99
      $region14: #{triatt_forward.1} parent=11 // pred_check_branch
        %165 = sbr.rel (%p163) target = $region16
      $region15: #{triatt_forward.1} parent=11 // pred_region
        _
      $region16: #{triatt_forward.1} parent=11 // pred_fallthru
        _
      // Predicated region
      $region17: #{triatt_forward.1} parent=11 // pred_check
        %p166 = pneg %p120
      $region18: #{triatt_forward.1} parent=11 // pred_check_branch
        %168 = sbr.rel (%p166) target = $region20
      $region19: #{triatt_forward.1} parent=11 // pred_region
        _
      $region20: #{triatt_forward.1} parent=11 // pred_fallthru
        _
    $region12: #{triatt_forward.1} parent=5 // pred_fallthru
      _
    %p169 = scmp.lt.s32.totalorder %s10, 2
    // Predicated region
    $region21: #{triatt_forward.1} parent=5 // pred_check
      %p170 = pneg %p169
    $region22: #{triatt_forward.1} parent=5 // pred_check_branch
      %172 = sbr.rel (%p170) target = $region24
    $region23: #{triatt_forward.1} parent=5 // pred_region
      // Predicated region
      $region25: #{triatt_forward.1} parent=23 // pred_check
        %p173 = pneg %p44
      $region26: #{triatt_forward.1} parent=23 // pred_check_branch
        %175 = sbr.rel (%p173) target = $region28
      $region27: #{triatt_forward.1} parent=23 // pred_region
        %s176 = smul.u32 2, %s18
        %p177 = scmp.lt.s32.totalorder %s17, 1
        %s178 = scalar_select %p177, %s17, 1
        %p179 = scmp.lt.s32.totalorder %s176, 1
        %s180 = scalar_select %p179, %s176, 1
        %s181 = smul.addr %s178, 32
        %s182 = sadd.s32 %s180, %s181
        %s183 = smul.addr %s182, 8
        %s184 = scalar_lea.vmem %s0, %s183
        %s185 = smul.u32 2, %s18
      $region28: #{triatt_forward.1} parent=23 // pred_fallthru
        _
      // Predicated region
      $region29: #{triatt_forward.1} parent=23 // pred_check
        %p186 = pneg %p72
      $region30: #{triatt_forward.1} parent=23 // pred_check_branch
        %188 = sbr.rel (%p186) target = $region32
      $region31: #{triatt_forward.1} parent=23 // pred_region
        %s189 = smul.u32 2, %s18
        %p190 = scmp.lt.s32.totalorder %s17, 1
        %s191 = scalar_select %p190, %s17, 1
        %p192 = scmp.lt.s32.totalorder %s189, 1
        %s193 = scalar_select %p192, %s189, 1
        %s194 = smul.addr %s191, 2
        %s195 = sadd.s32 %s193, %s194
        %s196 = smul.addr %s195, 8
        %s197 = scalar_lea.vmem %s1, %s196
        %s198 = smul.u32 2, %s18
      $region32: #{triatt_forward.1} parent=23 // pred_fallthru
        _
    $region24: #{triatt_forward.1} parent=5 // pred_fallthru
      _
    %p199 = scmp.le.s32.totalorder 1, %s10
    %p200 = scmp.lt.s32.totalorder %s10, 3
    %p201 = pnand %p199, %p200
    %p202 = pneg %p201
    // Predicated region
    $region33: #{triatt_forward.1} parent=5 // pred_check
      _
    $region34: #{triatt_forward.1} parent=5 // pred_check_branch
      %204 = sbr.rel (%p201) target = $region36
    $region35: #{triatt_forward.1} parent=5 // pred_region
      %s205 = ssub.s32 %s10, 1
      %s206 = smul.u32 2, %s20
      %p207 = scmp.lt.s32.totalorder %s19, 1
      %s208 = scalar_select %p207, %s19, 1
      %p209 = scmp.lt.s32.totalorder %s206, 1
      %s210 = scalar_select %p209, %s206, 1
      %s211 = smul.addr %s208, 32
      %s212 = sadd.s32 %s210, %s211
      %s213 = smul.addr %s212, 8
      %s214 = scalar_lea.vmem %s0, %s213
      %p215 = pneg %p50
      %p216 = pneg %p47
      %s217 = smul.u32 2, %s20
      %p218 = scmp.lt.s32.totalorder %s19, 1
      %s219 = scalar_select %p218, %s19, 1
      %p220 = scmp.lt.s32.totalorder %s217, 1
      %s221 = scalar_select %p220, %s217, 1
      %s222 = smul.addr %s219, 2
      %s223 = sadd.s32 %s221, %s222
      %s224 = smul.addr %s223, 8
      %s225 = scalar_lea.vmem %s1, %s224
      %p226 = pneg %p78
      %p227 = pneg %p75
      %p228 = pneg %p99
      %p229 = pneg %p96
      %p230 = pneg %p120
      %p231 = pneg %p117
      %p232 = pneg %p148
      %p233 = pneg %p145
      %s234 = smul.u32 2, %s20
      %p235 = scmp.lt.s32.totalorder %s19, 1
      %s236 = scalar_select %p235, %s19, 1
      %p237 = scmp.lt.s32.totalorder %s234, 1
      %s238 = scalar_select %p237, %s234, 1
      %s239 = smul.addr %s236, 2
      %s240 = sadd.s32 %s238, %s239
      %s241 = smul.addr %s240, 2
      %s242 = scalar_lea.vmem %s4, %s241
      %s243 = smul.u32 2, %s20
      %p244 = scmp.lt.s32.totalorder %s19, 1
      %s245 = scalar_select %p244, %s19, 1
      %p246 = scmp.lt.s32.totalorder %s243, 1
      %s247 = scalar_select %p246, %s243, 1
      %s248 = smul.addr %s245, 32
      %s249 = sadd.s32 %s247, %s248
      %s250 = smul.addr %s249, 8
      %s251 = scalar_lea.vmem %s0, %s250
      %s252 = smul.u32 2, %s20
      %s253 = smul.u32 2, %s20
      %p254 = scmp.lt.s32.totalorder %s19, 1
      %s255 = scalar_select %p254, %s19, 1
      %p256 = scmp.lt.s32.totalorder %s253, 1
      %s257 = scalar_select %p256, %s253, 1
      %s258 = smul.addr %s255, 2
      %s259 = sadd.s32 %s257, %s258
      %s260 = smul.addr %s259, 8
      %s261 = scalar_lea.vmem %s1, %s260
      %s262 = smul.u32 2, %s20
      %s263 = smul.u32 2, %s20
      %p264 = scmp.lt.s32.totalorder %s19, 1
      %s265 = scalar_select %p264, %s19, 1
      %p266 = scmp.lt.s32.totalorder %s263, 1
      %s267 = scalar_select %p266, %s263, 1
      %s268 = smul.addr %s265, 2
      %s269 = sadd.s32 %s267, %s268
      %s270 = smul.addr %s269, 2
      %s271 = scalar_lea.vmem %s4, %s270
      %s272 = smul.u32 2, %s20
      %v273 = vld [vmem:[%s251] sm:$0xff]
      %v274 = vld [vmem:[%s251 + $0x8] sm:$0xff]
      %v275 = vld [vmem:[%s251 + $0x10] sm:$0xff]
      %v276 = vld [vmem:[%s251 + $0x18] sm:$0xff]
      %v277 = vld [vmem:[%s251 + $0x20] sm:$0xff]
      %v278 = vld [vmem:[%s251 + $0x28] sm:$0xff]
      %v279 = vld [vmem:[%s251 + $0x30] sm:$0xff]
      %v280 = vld [vmem:[%s251 + $0x38] sm:$0xff]
      %v281 = vld [vmem:[%s251 + $0x40] sm:$0xff]
      %v282 = vld [vmem:[%s251 + $0x48] sm:$0xff]
      %v283 = vld [vmem:[%s251 + $0x50] sm:$0xff]
      %v284 = vld [vmem:[%s251 + $0x58] sm:$0xff]
      %v285 = vld [vmem:[%s251 + $0x60] sm:$0xff]
      %v286 = vld [vmem:[%s251 + $0x68] sm:$0xff]
      %v287 = vld [vmem:[%s251 + $0x70] sm:$0xff]
      %v288 = vld [vmem:[%s251 + $0x78] sm:$0xff]
      %v289 = vld [vmem:[%s251 + $0x80] sm:$0xff]
      %v290 = vld [vmem:[%s251 + $0x88] sm:$0xff]
      %v291 = vld [vmem:[%s251 + $0x90] sm:$0xff]
      %v292 = vld [vmem:[%s251 + $0x98] sm:$0xff]
      %v293 = vld [vmem:[%s251 + $0xa0] sm:$0xff]
      %v294 = vld [vmem:[%s251 + $0xa8] sm:$0xff]
      %v295 = vld [vmem:[%s251 + $0xb0] sm:$0xff]
      %v296 = vld [vmem:[%s251 + $0xb8] sm:$0xff]
      %v297 = vld [vmem:[%s251 + $0xc0] sm:$0xff]
      %v298 = vld [vmem:[%s251 + $0xc8] sm:$0xff]
      %v299 = vld [vmem:[%s251 + $0xd0] sm:$0xff]
      %v300 = vld [vmem:[%s251 + $0xd8] sm:$0xff]
      %v301 = vld [vmem:[%s251 + $0xe0] sm:$0xff]
      %v302 = vld [vmem:[%s251 + $0xe8] sm:$0xff]
      %v303 = vld [vmem:[%s251 + $0xf0] sm:$0xff]
      %v304 = vld [vmem:[%s251 + $0xf8] sm:$0xff]
      %v305 = vld [vmem:[%s261] sm:$0x1f]
      %v306 = vld [vmem:[%s261 + $0x8] sm:$0x1f]
      %v307 = vld [vmem:[%s3] sm:$0xff]
      %309 = vset.pattern.permute.xlu0 0
      %310 = vperm.xlu0 %309, %v307
      %v311 = vpop.permute.xlu0 %310
      %v313 = vmul.f32 %v305, %v311
      %v314 = vmul.f32 %v306, %v311
      %vm315 = vcmask 1043456
      %v316 = vsel %vm315, %v313, 0.0
      %v317 = vrot.slane %v316, 4
      %v318 = vadd.f32 %v316, %v317
      %v319 = vrot.slane %v318, 2
      %v320 = vadd.f32 %v318, %v319
      %v321 = vrot.slane %v320, 1
      %v322 = vadd.f32 %v320, %v321
      %v323 = vsel %vm315, %v314, 0.0
      %v324 = vrot.slane %v323, 4
      %v325 = vadd.f32 %v323, %v324
      %v326 = vrot.slane %v325, 2
      %v327 = vadd.f32 %v325, %v326
      %v328 = vrot.slane %v327, 1
      %v329 = vadd.f32 %v327, %v328
      %v330 = vadd.f32 %v322, %v311
      %v331 = vadd.f32 %v329, %v311
      %v332 = vxor.u32 %v330, 2147483648
      %v333 = vxor.u32 %v331, 2147483648
      %v334 = vmul.f32 %v332, 1.442695
      %v335 = vpow.pop %v334
      %v336 = vmul.f32 %v333, 1.442695
      %v337 = vpow.pop %v336
      %v338 = vadd.f32 %v335, 1.0
      %v339 = vadd.f32 %v337, 1.0
      %v340 = vrcp.pop %v338
      %v341 = vmul.f32 1.0, %v340
      %v342 = vrcp.pop %v339
      %v343 = vmul.f32 1.0, %v342
      %v344 = vadd.f32 %v305, 1.0
      %v345 = vadd.f32 %v306, 1.0
      %v346 = vadd.f32 %v341, 1.0
      %v347 = vadd.f32 %v343, 1.0
      %v348 = vmul.f32 %v344, %v346
      %v349 = vmul.f32 %v345, %v347
      %v350 = vld [vmem:[%s2] sm:$0x3]
      %351 = vmatprep.subr.mxu0 %v274
      %352 = vmatpush1.msra.mxu0 %v273
      %353 = vmatprep.subr.mxu0 %v276
      %354 = vmatpush1.msra.mxu0 %v275
      %355 = vmatprep.subr.mxu0 %v278
      %356 = vmatpush1.msra.mxu0 %v277
      %357 = vmatprep.subr.mxu0 %v280
      %358 = vmatpush1.msra.mxu0 %v279
      %359 = vmatprep.subr.mxu0 %v282
      %360 = vmatpush1.msra.mxu0 %v281
      %361 = vmatprep.subr.mxu0 %v284
      %362 = vmatpush1.msra.mxu0 %v283
      %363 = vmatprep.subr.mxu0 %v286
      %364 = vmatpush1.msra.mxu0 %v285
      %365 = vmatprep.subr.mxu0 %v288
      %366 = vmatpush1.msra.mxu0 %v287
      %367 = vmatprep.subr.mxu0 %v290
      %368 = vmatpush1.msra.mxu0 %v289
      %369 = vmatprep.subr.mxu0 %v292
      %370 = vmatpush1.msra.mxu0 %v291
      %371 = vmatprep.subr.mxu0 %v294
      %372 = vmatpush1.msra.mxu0 %v293
      %373 = vmatprep.subr.mxu0 %v296
      %374 = vmatpush1.msra.mxu0 %v295
      %375 = vmatprep.subr.mxu0 %v298
      %376 = vmatpush1.msra.mxu0 %v297
      %377 = vmatprep.subr.mxu0 %v300
      %378 = vmatpush1.msra.mxu0 %v299
      %379 = vmatprep.subr.mxu0 %v302
      %380 = vmatpush1.msra.mxu0 %v301
      %381 = vmatprep.subr.mxu0 %v304
      %382 = vmatpush1.msra.mxu0 %v303
      %383 = vmatprep.subr.mxu0 0.0
      %384 = vmatpush1.msra.mxu0 0.0
      %385 = vmatprep.subr.mxu0 0.0
      %386 = vmatpush1.msra.mxu0 0.0
      %387 = vmatprep.subr.mxu0 0.0
      %388 = vmatpush1.msra.mxu0 0.0
      %389 = vmatprep.subr.mxu0 0.0
      %390 = vmatpush1.msra.mxu0 0.0
      %391 = vmatprep.subr.mxu0 0.0
      %392 = vmatpush1.msra.mxu0 0.0
      %393 = vmatprep.subr.mxu0 0.0
      %394 = vmatpush1.msra.mxu0 0.0
      %395 = vmatprep.subr.mxu0 0.0
      %396 = vmatpush1.msra.mxu0 0.0
      %397 = vmatprep.subr.mxu0 0.0
      %398 = vmatpush1.msra.mxu0 0.0
      %399 = vmatprep.subr.mxu0 0.0
      %400 = vmatpush1.msra.mxu0 0.0
      %401 = vmatprep.subr.mxu0 0.0
      %402 = vmatpush1.msra.mxu0 0.0
      %403 = vmatprep.subr.mxu0 0.0
      %404 = vmatpush1.msra.mxu0 0.0
      %405 = vmatprep.subr.mxu0 0.0
      %406 = vmatpush1.msra.mxu0 0.0
      %407 = vmatprep.subr.mxu0 0.0
      %408 = vmatpush1.msra.mxu0 0.0
      %409 = vmatprep.subr.mxu0 0.0
      %410 = vmatpush1.msra.mxu0 0.0
      %411 = vmatprep.subr.mxu0 0.0
      %412 = vmatpush1.msra.mxu0 0.0
      %413 = vmatprep.subr.mxu0 0.0
      %414 = vmatpush1.msra.mxu0 0.0
      %415 = vmatprep.mubr.f32.mxu0 0.0
      %416 = vmatmul.mubr.f32.gmra.mrb[0].mxu0 %v350
      %v417 = vpop.f32.mrb[0].mxu0
      %v418 = vadd.f32 0.0, %v417
      %v419 = vpop.f32.mrb[0].mxu0
      %v420 = vadd.f32 0.0, %v419
      %421 = vdwg.mxu0
      %v422 = vlaneseq
      %v423 = vshrl.u32 %v422, 7
      %v424 = vsub.s32 4, %v423
      %v425 = vrot.slane %v348, %v424
      %v426 = vlaneseq
      %v427 = vshrl.u32 %v426, 7
      %v428 = vsub.s32 4, %v427
      %v429 = vrot.slane %v349, %v428
      %v430 = vmul.f32 %v418, %v425
      %v431 = vmul.f32 %v420, %v429
      %v432 = vrot.slane %v311, 5
      %v434 = vadd.f32 %v430, %v432
      %v435 = vadd.f32 %v431, %v432
      %v438 = vcombine.low %v434, %v435
      %v440 = vunpack.c.l.s4 1983009808
      %v441 = vunpack.c.0.s8 %v440
      %v442 = vlaneseq
      %v443 = vshrl.u32 %v442, 7
      %v444 = vsub.s32 %v441, %v443
      %v445 = vrot.slane %v438, %v444
      %447 = vst [vmem:[%s271] sm:$0xf] %v445
      %s448 = smul.u32 2, %s20
      %p449 = scmp.lt.s32.totalorder %s19, 1
      %s450 = scalar_select %p449, %s19, 1
      %p451 = scmp.lt.s32.totalorder %s448, 1
      %s452 = scalar_select %p451, %s448, 1
      %s453 = smul.addr %s450, 2
      %s454 = sadd.s32 %s452, %s453
      %s455 = smul.addr %s454, 2
      %s456 = scalar_lea.vmem %s4, %s455
      // Predicated region
      $region37: #{triatt_forward.1} parent=35 // pred_check
        %p457 = pneg %p145
      $region38: #{triatt_forward.1} parent=35 // pred_check_branch
        %459 = sbr.rel (%p457) target = $region40
      $region39: #{triatt_forward.1} parent=35 // pred_region
        %s460 = smul.u32 2, %s20
      $region40: #{triatt_forward.1} parent=35 // pred_fallthru
        _
    $region36: #{triatt_forward.1} parent=5 // pred_fallthru
      _
    %p461 = scmp.le.s32.totalorder 2, %s10
    // Predicated region
    $region41: #{triatt_forward.1} parent=5 // pred_check
      %p462 = pneg %p461
    $region42: #{triatt_forward.1} parent=5 // pred_check_branch
      %464 = sbr.rel (%p462) target = $region44
    $region43: #{triatt_forward.1} parent=5 // pred_region
      %s465 = ssub.s32 %s10, 2
      // Predicated region
      $region45: #{triatt_forward.1} parent=43 // pred_check
        %p466 = pneg %p151
      $region46: #{triatt_forward.1} parent=43 // pred_check_branch
        %468 = sbr.rel (%p466) target = $region48
      $region47: #{triatt_forward.1} parent=43 // pred_region
        %s469 = smul.u32 2, %s22
        %p470 = scmp.lt.s32.totalorder %s21, 1
        %s471 = scalar_select %p470, %s21, 1
        %p472 = scmp.lt.s32.totalorder %s469, 1
        %s473 = scalar_select %p472, %s469, 1
        %s474 = smul.addr %s471, 2
        %s475 = sadd.s32 %s473, %s474
        %s476 = smul.addr %s475, 2
        %s477 = scalar_lea.vmem %s4, %s476
      $region48: #{triatt_forward.1} parent=43 // pred_fallthru
        _
    $region44: #{triatt_forward.1} parent=5 // pred_fallthru
      _
  $region6: #{triatt_forward.1} parent=0 // loop_footer
    %s14 = sadd.s32 1, %s10
  $region7: #{triatt_forward.1} parent=0 // loop_footer_branch
    %9 = sbr.rel target = $region3
  $region8: #{triatt_forward.1} parent=0 // loop_exit
    _

</llo_original>
